<compile_context>
chip_gen: v7x
topology: tpu7x:2x2x1
jax: 0.10.0
libtpu: 0.0.40
codegen_flags: <defaults>
</compile_context>

<pallas_src>
import functools

import jax
import jax.numpy as jnp
from jax import lax
from jax.experimental import pallas as pl
from jax.experimental.pallas import tpu as pltpu


_INV_SQRT2 = 0.7071067811865476


def _round_up(x, m):
    return (x + m - 1) // m * m


def _tpu_defaults():
    """Returns (vmem_capacity_bytes, default token tile). Best-effort query."""
    vmem_cap = 128 << 20
    gen = ""
    try:
        info = pltpu.get_tpu_info()
        vmem_cap = int(getattr(info, "vmem_capacity_bytes", vmem_cap))
        for attr in ("chip_version", "version", "chip_name", "name"):
            val = getattr(info, attr, None)
            if val is not None:
                gen = str(val).lower()
                break
    except Exception:
        pass
    is_v5 = ("v5" in gen) or ("5e" in gen) or ("5p" in gen)
    # v5e: ~197 TF/s bf16 vs ~0.82 TB/s -> tm~256 already sits at the compute
    # roofline.  v6e/v7x need tm~512+ (bf16) to leave the HBM roofline.
    tm_default = 256 if is_v5 else 512
    return vmem_cap, tm_default


def _transform_kernel(x_ref, w1_ref, b1_ref, gamma_ref, beta_ref, hn_ref, *,
                      eps, approx_gelu):
    # Dense transform: x @ W1 + b1 (f32 accumulation on the MXU).
    h = jnp.dot(x_ref[...], w1_ref[...], preferred_element_type=jnp.float32)
    h = h + b1_ref[...]

    if approx_gelu:
        # tanh-GELU routes to the EUP slot (useful on v5e); slight numerics
        # difference vs torch.nn.GELU's default erf formulation.
        h = jax.nn.gelu(h, approximate=True)
    else:
        # Exact erf GELU — matches torch.nn.GELU default.
        h = 0.5 * h * (1.0 + lax.erf(h * jnp.float32(_INV_SQRT2)))

    # LayerNorm over the feature axis, all in f32.  Rows of a ragged last token
    # tile contain unspecified data; their (possibly extreme) LN outputs are
    # masked on the out-of-bounds store, so they never reach the result.
    mu = jnp.mean(h, axis=-1, keepdims=True)
    diff = h - mu
    var = jnp.mean(diff * diff, axis=-1, keepdims=True)
    hn = diff * lax.rsqrt(var + jnp.float32(eps))
    hn = hn * gamma_ref[...] + beta_ref[...]
    # NOTE: with matmul_dtype=bf16 the normalized activations are stored in
    # bf16 (one extra rounding vs PyTorch, documented).
    hn_ref[...] = hn.astype(hn_ref.dtype)


def _decoder_kernel(hn_ref, w2_ref, b2_ref, o_ref):
    # Dominant matmul: hn tile @ W2 vocab tile (+ b2), f32 accumulation.
    out = jnp.dot(hn_ref[...], w2_ref[...], preferred_element_type=jnp.float32)
    o_ref[...] = (out + b2_ref[...]).astype(o_ref.dtype)


def bert_mlm_head(hidden_states, params, *, eps=1e-12, tm=None, tn=None,
                  matmul_dtype=jnp.bfloat16, out_dtype=None,
                  approx_gelu=False):
    """hidden_states: (B, S, D) -> logits (B, S, V).

    params = (w1 (D,D), b1 (1,D), gamma (1,D), beta (1,D), w2 (D,V), b2 (1,V));
    weights are stored (in_features, out_features) == torch Linear.weight.T.

    matmul_dtype: dtype of matmul operands + the hn intermediate.  Default
      bf16 (MXU-native, halves HBM traffic); pass jnp.float32 (or None) for
      exact parity with the PyTorch module.
    out_dtype: logits dtype (default = input dtype; jnp.bfloat16 halves the
      logit writeback stream).
    """
    w1, b1, gamma, beta, w2, b2 = params
    B, S, D = hidden_states.shape
    V = w2.shape[1]
    N = B * S
    if out_dtype is None:
        out_dtype = hidden_states.dtype
    if matmul_dtype is None:
        matmul_dtype = jnp.float32
    matmul_dtype = jnp.dtype(matmul_dtype)

    # ---- cast BEFORE the DMA (halves the dominant W2 HBM stream for bf16) ----
    x2d = hidden_states.reshape(N, D).astype(matmul_dtype)
    w1 = w1.astype(matmul_dtype)
    w2 = w2.astype(matmul_dtype)
    # Biases / LN params stay f32 (added after f32 accumulation / f32 LN math).
    b1 = b1.reshape(1, D).astype(jnp.float32)
    gamma = gamma.reshape(1, D).astype(jnp.float32)
    beta = beta.reshape(1, D).astype(jnp.float32)
    b2 = b2.reshape(1, V).astype(jnp.float32)

    mm_bytes = matmul_dtype.itemsize
    out_bytes = jnp.dtype(out_dtype).itemsize

    # ---- generation-aware tiles & VMEM budget ----
    vmem_cap, tm_default = _tpu_defaults()
    if tm is None:
        tm = tm_default
    if tn is None:
        tn = 4096
    tm = max(8, min(_round_up(tm, 8), _round_up(N, 8)))
    tn = max(128, min(_round_up(tn, 128), _round_up(V, 128)))

    def decoder_vmem(tm_, tn_):
        return (2 * tm_ * D * mm_bytes          # hn tiles (double-buffered)
                + 2 * D * tn_ * mm_bytes        # W2 vocab tiles
                + 2 * 8 * tn_ * 4               # b2 tiles (sublane-padded)
                + 2 * tm_ * tn_ * out_bytes)    # output tiles

    budget = int(vmem_cap * 0.75)               # leave pipeline/scratch headroom
    for _ in range(16):
        if decoder_vmem(tm, tn) <= budget:
            break
        if tn > 1024:
            tn = max(1024, tn // 2)
        elif tm > 256:
            tm = max(256, _round_up(tm // 2, 8))
        else:
            break

    # =====================  phase 1: transform  =====================
    grid_t = (pl.cdiv(N, tm),)
    transform_vmem = (2 * tm * D * mm_bytes     # x tiles
                      + 2 * D * D * mm_bytes    # W1 (fetched once, 2 buffers)
                      + 2 * tm * D * mm_bytes   # hn output tiles
                      + 6 * 8 * D * 4)          # b1 / gamma / beta
    transform_limit = min(int(transform_vmem * 1.5) + (8 << 20),
                          int(vmem_cap * 0.9))
    t_cost = pl.CostEstimate(
        flops=2 * N * D * D + 10 * N * D,
        transcendentals=N * D,
        bytes_accessed=2 * N * D * mm_bytes + D * D * mm_bytes + 3 * D * 4,
    )

    hn = pl.pallas_call(
        functools.partial(_transform_kernel, eps=eps, approx_gelu=approx_gelu),
        out_shape=jax.ShapeDtypeStruct((N, D), matmul_dtype),
        grid_spec=pltpu.PrefetchScalarGridSpec(
            num_scalar_prefetch=0,
            grid=grid_t,
            in_specs=[
                pl.BlockSpec((tm, D), lambda i: (i, 0)),   # x token tile
                pl.BlockSpec((D, D), lambda i: (0, 0)),    # W1 (constant index)
                pl.BlockSpec((1, D), lambda i: (0, 0)),    # b1
                pl.BlockSpec((1, D), lambda i: (0, 0)),    # LN gamma
                pl.BlockSpec((1, D), lambda i: (0, 0)),    # LN beta
            ],
            out_specs=pl.BlockSpec((tm, D), lambda i: (i, 0)),
        ),
        compiler_params=pltpu.CompilerParams(
            dimension_semantics=("parallel",),
            vmem_limit_bytes=transform_limit,
        ),
        cost_estimate=t_cost,
    )(x2d, w1, b1, gamma, beta)

    # =====================  phase 2: decoder  =====================
    # Vocab axis OUTER / token axis INNER: W2's index_map depends only on the
    # outer index, so each (D, tn) W2 block is DMA'd from HBM exactly once.
    grid_d = (pl.cdiv(V, tn), pl.cdiv(N, tm))
    n_vocab_tiles = grid_d[0]
    decoder_limit = min(int(decoder_vmem(tm, tn) * 1.25) + (8 << 20),
                        int(vmem_cap * 0.9))
    d_cost = pl.CostEstimate(
        flops=2 * N * D * V,
        transcendentals=0,
        bytes_accessed=(D * V * mm_bytes                    # W2: streamed once
                        + n_vocab_tiles * N * D * mm_bytes  # hn re-streamed
                        + V * 4
                        + N * V * out_bytes),               # logits writeback
    )

    out2d = pl.pallas_call(
        _decoder_kernel,
        out_shape=jax.ShapeDtypeStruct((N, V), out_dtype),
        grid_spec=pltpu.PrefetchScalarGridSpec(
            num_scalar_prefetch=0,
            grid=grid_d,
            in_specs=[
                pl.BlockSpec((tm, D), lambda j, i: (i, 0)),   # hn token tile
                pl.BlockSpec((D, tn), lambda j, i: (0, j)),   # W2 vocab tile
                pl.BlockSpec((1, tn), lambda j, i: (0, j)),   # b2 vocab tile
            ],
            out_specs=pl.BlockSpec((tm, tn), lambda j, i: (i, j)),
        ),
        compiler_params=pltpu.CompilerParams(
            # Vocab (outer) axis is the one megacore may split -> each core
            # still loads its W2 slice exactly once.
            dimension_semantics=("parallel", "arbitrary"),
            vmem_limit_bytes=decoder_limit,
        ),
        cost_estimate=d_cost,
    )(hn, w2, b2)

    return out2d.reshape(B, S, V)


def _reference(hidden_states, params, eps=1e-12):
    """Pure-JAX f32 reference of the PyTorch forward pass."""
    w1, b1, gamma, beta, w2, b2 = params
    B, S, D = hidden_states.shape
    x = hidden_states.reshape(-1, D).astype(jnp.float32)
    h = jnp.dot(x, w1.astype(jnp.float32),
                precision=lax.Precision.HIGHEST) + b1.reshape(-1)
    h = 0.5 * h * (1.0 + lax.erf(h * jnp.float32(_INV_SQRT2)))
    mu = jnp.mean(h, axis=-1, keepdims=True)
    var = jnp.mean((h - mu) ** 2, axis=-1, keepdims=True)
    hn = (h - mu) * lax.rsqrt(var + jnp.float32(eps)) * gamma.reshape(-1) \
         + beta.reshape(-1)
    out = jnp.dot(hn, w2.astype(jnp.float32),
                  precision=lax.Precision.HIGHEST) + b2.reshape(-1)
    return out.reshape(B, S, -1)


def init_params(key, d_model, vocab_size, dtype=jnp.float32):
    """Deterministic synthetic parameters (shapes match the PyTorch module)."""
    k1, k2, k3, k4 = jax.random.split(key, 4)
    scale = 1.0 / jnp.sqrt(d_model)
    # stored as (in_features, out_features) == torch Linear.weight.T
    w1 = jax.random.uniform(k1, (d_model, d_model), dtype, -scale, scale)
    b1 = jax.random.uniform(k2, (1, d_model), dtype, -scale, scale)
    gamma = jnp.ones((1, d_model), dtype)
    beta = jnp.zeros((1, d_model), dtype)
    w2 = jax.random.uniform(k3, (d_model, vocab_size), dtype, -scale, scale)
    b2 = jax.random.uniform(k4, (1, vocab_size), dtype, -scale, scale)
    return (w1, b1, gamma, beta, w2, b2)


if __name__ == "__main__":
    # small shapes: batch=2, seq=8, d_model=128, vocab=256
    B, S, D, V = 2, 8, 128, 256
    key = jax.random.PRNGKey(0)
    kx, kp = jax.random.split(key)
    hidden_states = jax.random.normal(kx, (B, S, D), jnp.float32)
    params = init_params(kp, D, V)

    ref = _reference(hidden_states, params)

    # Exact-parity path (f32 matmul operands) — tight tolerance.
    logits_f32 = bert_mlm_head(hidden_states, params, matmul_dtype=jnp.float32)
    jax.block_until_ready(logits_f32)
    assert logits_f32.shape == (B, S, V), logits_f32.shape
    assert jnp.allclose(logits_f32, ref, rtol=1e-4, atol=1e-4), \
        float(jnp.max(jnp.abs(logits_f32 - ref)))

    # Default fast path (bf16 operands, f32 accumulation / LayerNorm).
    logits = bert_mlm_head(hidden_states, params)
    jax.block_until_ready(logits)
    assert logits.shape == (B, S, V), logits.shape
    assert jnp.allclose(logits, ref, rtol=3e-2, atol=3e-2), \
        float(jnp.max(jnp.abs(logits - ref)))

    print("KERNEL_OK")
</pallas_src>

<mosaic_0001>
module attributes {stable_mosaic.version = 11 : i64} {
  func.func @_transform_kernel(%arg0: i32, %arg1: memref<16x128xf32, #tpu.memory_space<vmem>>, %arg2: memref<128x128xf32, #tpu.memory_space<vmem>>, %arg3: memref<1x128xf32, #tpu.memory_space<vmem>>, %arg4: memref<1x128xf32, #tpu.memory_space<vmem>>, %arg5: memref<1x128xf32, #tpu.memory_space<vmem>>, %arg6: memref<16x128xf32, #tpu.memory_space<vmem>>) attributes {dimension_semantics = [#tpu.dimension_semantics<parallel>], iteration_bounds = array<i64: 1>, scalar_prefetch = 0 : i64, scratch_operands = 0 : i64, tpu.core_type = #tpu.core_type<tc>, window_params = [{transform_indices = @transform_0, window_bounds = array<i64: 16, 128>}, {pipeline_mode = #tpu.pipeline_mode<synchronous>, transform_indices = @transform_1, window_bounds = array<i64: 128, 128>}, {pipeline_mode = #tpu.pipeline_mode<synchronous>, transform_indices = @transform_2, window_bounds = array<i64: 1, 128>}, {pipeline_mode = #tpu.pipeline_mode<synchronous>, transform_indices = @transform_3, window_bounds = array<i64: 1, 128>}, {pipeline_mode = #tpu.pipeline_mode<synchronous>, transform_indices = @transform_4, window_bounds = array<i64: 1, 128>}, {transform_indices = @transform_5, window_bounds = array<i64: 16, 128>}]} {
    %c0 = arith.constant 0 : index
    %c0_0 = arith.constant 0 : index
    %0 = vector.load %arg1[%c0, %c0_0] : memref<16x128xf32, #tpu.memory_space<vmem>>, vector<16x128xf32>
    %c0_1 = arith.constant 0 : index
    %c0_2 = arith.constant 0 : index
    %1 = vector.load %arg2[%c0_1, %c0_2] : memref<128x128xf32, #tpu.memory_space<vmem>>, vector<128x128xf32>
    %cst = arith.constant dense<0.000000e+00> : vector<16x128xf32>
    %2 = tpu.matmul %0, %1, %cst {dimension_numbers = #tpu.dot_dimension_numbers<[1], [0], [0], [1], [0, 0, 1, 1], [], []>} : vector<16x128xf32>, vector<128x128xf32>, vector<16x128xf32> -> vector<16x128xf32>
    %c0_3 = arith.constant 0 : index
    %c0_4 = arith.constant 0 : index
    %3 = vector.load %arg3[%c0_3, %c0_4] : memref<1x128xf32, #tpu.memory_space<vmem>>, vector<1x128xf32>
    %4 = vector.broadcast %3 : vector<1x128xf32> to vector<16x128xf32>
    %5 = arith.addf %2, %4 : vector<16x128xf32>
    %cst_5 = arith.constant 5.000000e-01 : f32
    %6 = vector.broadcast %cst_5 : f32 to vector<16x128xf32>
    %7 = arith.mulf %6, %5 : vector<16x128xf32>
    %cst_6 = arith.constant 0.707106769 : f32
    %8 = vector.broadcast %cst_6 : f32 to vector<16x128xf32>
    %9 = arith.mulf %5, %8 : vector<16x128xf32>
    %10 = math.erf %9 : vector<16x128xf32>
    %cst_7 = arith.constant 1.000000e+00 : f32
    %11 = vector.broadcast %cst_7 : f32 to vector<16x128xf32>
    %12 = arith.addf %11, %10 : vector<16x128xf32>
    %13 = arith.mulf %7, %12 : vector<16x128xf32>
    %cst_8 = arith.constant dense<0.000000e+00> : vector<16xf32>
    %14 = vector.multi_reduction <add>, %13, %cst_8 [1] : vector<16x128xf32> to vector<16xf32>
    %15 = vector.shape_cast %14 : vector<16xf32> to vector<16x1xf32>
    %cst_9 = arith.constant 1.280000e+02 : f32
    %16 = vector.broadcast %cst_9 : f32 to vector<16x1xf32>
    %17 = arith.divf %15, %16 : vector<16x1xf32>
    %18 = vector.broadcast %17 : vector<16x1xf32> to vector<16x128xf32>
    %19 = arith.subf %13, %18 : vector<16x128xf32>
    %20 = arith.mulf %19, %19 : vector<16x128xf32>
    %cst_10 = arith.constant dense<0.000000e+00> : vector<16xf32>
    %21 = vector.multi_reduction <add>, %20, %cst_10 [1] : vector<16x128xf32> to vector<16xf32>
    %22 = vector.shape_cast %21 : vector<16xf32> to vector<16x1xf32>
    %cst_11 = arith.constant 1.280000e+02 : f32
    %23 = vector.broadcast %cst_11 : f32 to vector<16x1xf32>
    %24 = arith.divf %22, %23 : vector<16x1xf32>
    %cst_12 = arith.constant 9.99999996E-13 : f32
    %25 = vector.broadcast %cst_12 : f32 to vector<16x1xf32>
    %26 = arith.addf %24, %25 : vector<16x1xf32>
    %27 = math.rsqrt %26 : vector<16x1xf32>
    %28 = vector.broadcast %27 : vector<16x1xf32> to vector<16x128xf32>
    %29 = arith.mulf %19, %28 : vector<16x128xf32>
    %c0_13 = arith.constant 0 : index
    %c0_14 = arith.constant 0 : index
    %30 = vector.load %arg4[%c0_13, %c0_14] : memref<1x128xf32, #tpu.memory_space<vmem>>, vector<1x128xf32>
    %31 = vector.broadcast %30 : vector<1x128xf32> to vector<16x128xf32>
    %32 = arith.mulf %29, %31 : vector<16x128xf32>
    %c0_15 = arith.constant 0 : index
    %c0_16 = arith.constant 0 : index
    %33 = vector.load %arg5[%c0_15, %c0_16] : memref<1x128xf32, #tpu.memory_space<vmem>>, vector<1x128xf32>
    %34 = vector.broadcast %33 : vector<1x128xf32> to vector<16x128xf32>
    %35 = arith.addf %32, %34 : vector<16x128xf32>
    %c0_17 = arith.constant 0 : index
    %c0_18 = arith.constant 0 : index
    %36 = vector.load %arg6[%c0_17, %c0_18] : memref<16x128xf32, #tpu.memory_space<vmem>>, vector<16x128xf32>
    tpu.vector_store %arg6[%c0_17, %c0_18], %35 {strides = array<i32>} : memref<16x128xf32, #tpu.memory_space<vmem>>, vector<16x128xf32>,
    return
  }
  func.func @transform_0(%arg0: i32) -> (i32, i32) {
    %c0_i32 = arith.constant 0 : i32
    %c0_i32_0 = arith.constant 0 : i32
    return %arg0, %c0_i32 : i32, i32
  }
  func.func @transform_1(%arg0: i32) -> (i32, i32) {
    %c0_i32 = arith.constant 0 : i32
    %c0_i32_0 = arith.constant 0 : i32
    %c0_i32_1 = arith.constant 0 : i32
    return %c0_i32, %c0_i32_0 : i32, i32
  }
  func.func @transform_2(%arg0: i32) -> (i32, i32) {
    %c0_i32 = arith.constant 0 : i32
    %c0_i32_0 = arith.constant 0 : i32
    %c0_i32_1 = arith.constant 0 : i32
    return %c0_i32, %c0_i32_0 : i32, i32
  }
  func.func @transform_3(%arg0: i32) -> (i32, i32) {
    %c0_i32 = arith.constant 0 : i32
    %c0_i32_0 = arith.constant 0 : i32
    %c0_i32_1 = arith.constant 0 : i32
    return %c0_i32, %c0_i32_0 : i32, i32
  }
  func.func @transform_4(%arg0: i32) -> (i32, i32) {
    %c0_i32 = arith.constant 0 : i32
    %c0_i32_0 = arith.constant 0 : i32
    %c0_i32_1 = arith.constant 0 : i32
    return %c0_i32, %c0_i32_0 : i32, i32
  }
  func.func @transform_5(%arg0: i32) -> (i32, i32) {
    %c0_i32 = arith.constant 0 : i32
    %c0_i32_0 = arith.constant 0 : i32
    return %arg0, %c0_i32 : i32, i32
  }
}

</mosaic_0001>

<llo_original>
// kernel: tpu_custom_call.1
$region0: #{tpu_custom_call.1}
  #allocation0 [shape = 'u32[]', space=smem, size = 0x4, offset = 0x4, fixed_abs, tag = 'smem constant byte address 0x4 - core index']
  #allocation1 [shape = 'u32[144,128]{1,0:T(1,128)}', space=vmem, size = 0x12000, scoped, tag = 'internal scratch']
  %s0 = inlined_call_operand.hbm [shape: f32[16,128], index: 0, kind: input, shape index: {}]
  %s1 = inlined_call_operand.hbm [shape: f32[128,128], index: 1, kind: input, shape index: {}]
  %s2 = inlined_call_operand.vmem [shape: f32[1,128], index: 2, kind: input, shape index: {}]
  %s3 = inlined_call_operand.vmem [shape: f32[1,128], index: 3, kind: input, shape index: {}]
  %s4 = inlined_call_operand.vmem [shape: f32[1,128], index: 4, kind: input, shape index: {}]
  %s5 = inlined_call_operand.hbm [shape: f32[16,128], index: 5, kind: output, shape index: {}]
  %s6 = sld [smem:[#allocation0]]
  $region38: #{tpu_custom_call.1} parent=0
    _
  %s8 = ssub.s32 1, %s6
  %s9 = scalar_select 0, %s8, %s6
  $region1: #{tpu_custom_call.1} parent=0
    #allocation2 [shape = 'u8[8192]{0}', space=vmem, size = 0x2000, scoped, tag = 'input window, operand 0, single buffered']
    #allocation3 [shape = 's32[1]{0}', space=sflag, size = 0x4, scoped, tag = 'scoped memory for tpu_custom_call.1']
    #allocation4 [shape = 's32[1]{0}', space=sflag, size = 0x4, scoped, tag = 'scoped memory for tpu_custom_call.1']
    #allocation5 [shape = 'u8[65536]{0}', space=vmem, size = 0x10000, scoped, tag = 'input window, operand 1, single buffered']
    #allocation6 [shape = 's32[1]{0}', space=sflag, size = 0x4, scoped, tag = 'scoped memory for tpu_custom_call.1']
    #allocation7 [shape = 'u8[8192]{0}', space=vmem, size = 0x2000, scoped, tag = 'output window, operand 0, single buffered']
    %10 = vsyncpa [#allocation3], 0
    %11 = vsyncpa [#allocation6], 0
    %12 = vsyncpa [#allocation4], 0
    // Predicated region
    $region2: #{tpu_custom_call.1} parent=1 // pred_check
      _
    $region3: #{tpu_custom_call.1} parent=1 // pred_check_branch
      %14 = sbr.rel (0) target = $region5
    $region4: #{tpu_custom_call.1} parent=1 // pred_region
      %s16 = ssub.s32 256, 256
      %17 = vsyncadd [#allocation3], %s16
      %s18 = sshll.u32 [#allocation2], 4
      %s19 = int_to_ptr.vmem [resolvable:$true] %s18
      %24 = dma.hbm_to_vmem [thread:$0]  %s0, 256, %s19, [#allocation3], 128, 128, 8
    $region5: #{tpu_custom_call.1} parent=1 // pred_fallthru
      _
    // Predicated region
    $region6: #{tpu_custom_call.1} parent=1 // pred_check
      _
    $region7: #{tpu_custom_call.1} parent=1 // pred_check_branch
      %26 = sbr.rel (0) target = $region9
    $region8: #{tpu_custom_call.1} parent=1 // pred_region
      %s28 = ssub.s32 2048, 2048
      %29 = vsyncadd [#allocation6], %s28
      %s30 = sshll.u32 [#allocation5], 4
      %s31 = int_to_ptr.vmem [resolvable:$true] %s30
      %36 = dma.hbm_to_vmem [thread:$0]  %s1, 2048, %s31, [#allocation6], 128, 128, 8
    $region9: #{tpu_custom_call.1} parent=1 // pred_fallthru
      _
    // Predicated region
    $region10: #{tpu_custom_call.1} parent=1 // pred_check
      _
    $region11: #{tpu_custom_call.1} parent=1 // pred_check_branch
      %38 = sbr.rel (0) target = $region13
    $region12: #{tpu_custom_call.1} parent=1 // pred_region
      _
    $region13: #{tpu_custom_call.1} parent=1 // pred_fallthru
      _
    // Predicated region
    $region14: #{tpu_custom_call.1} parent=1 // pred_check
      _
    $region15: #{tpu_custom_call.1} parent=1 // pred_check_branch
      %40 = sbr.rel (0) target = $region17
    $region16: #{tpu_custom_call.1} parent=1 // pred_region
      _
    $region17: #{tpu_custom_call.1} parent=1 // pred_fallthru
      _
    // Predicated region
    $region18: #{tpu_custom_call.1} parent=1 // pred_check
      _
    $region19: #{tpu_custom_call.1} parent=1 // pred_check_branch
      %42 = sbr.rel (0) target = $region21
    $region20: #{tpu_custom_call.1} parent=1 // pred_region
      _
    $region21: #{tpu_custom_call.1} parent=1 // pred_fallthru
      _
    // Predicated region
    $region22: #{tpu_custom_call.1} parent=1 // pred_check
      _
    $region23: #{tpu_custom_call.1} parent=1 // pred_check_branch
      %44 = sbr.rel (0) target = $region25
    $region24: #{tpu_custom_call.1} parent=1 // pred_region
      %45 = dma.done [#allocation3], 256
    $region25: #{tpu_custom_call.1} parent=1 // pred_fallthru
      _
    // Predicated region
    $region26: #{tpu_custom_call.1} parent=1 // pred_check
      _
    $region27: #{tpu_custom_call.1} parent=1 // pred_check_branch
      %47 = sbr.rel (0) target = $region29
    $region28: #{tpu_custom_call.1} parent=1 // pred_region
      %48 = dma.done [#allocation6], 2048
    $region29: #{tpu_custom_call.1} parent=1 // pred_fallthru
      _
    %v49 = vld [vmem:[#allocation2] sm:$0xff]
    %v50 = vld [vmem:[#allocation2 + $0x8] sm:$0xff]
    %v51 = vld [vmem:[#allocation5] sm:$0xff]
    %v52 = vld [vmem:[#allocation5 + $0x8] sm:$0xff]
    %v53 = vld [vmem:[#allocation5 + $0x10] sm:$0xff]
    %v54 = vld [vmem:[#allocation5 + $0x18] sm:$0xff]
    %v55 = vld [vmem:[#allocation5 + $0x20] sm:$0xff]
    %v56 = vld [vmem:[#allocation5 + $0x28] sm:$0xff]
    %v57 = vld [vmem:[#allocation5 + $0x30] sm:$0xff]
    %v58 = vld [vmem:[#allocation5 + $0x38] sm:$0xff]
    %v59 = vld [vmem:[#allocation5 + $0x40] sm:$0xff]
    %v60 = vld [vmem:[#allocation5 + $0x48] sm:$0xff]
    %v61 = vld [vmem:[#allocation5 + $0x50] sm:$0xff]
    %v62 = vld [vmem:[#allocation5 + $0x58] sm:$0xff]
    %v63 = vld [vmem:[#allocation5 + $0x60] sm:$0xff]
    %v64 = vld [vmem:[#allocation5 + $0x68] sm:$0xff]
    %v65 = vld [vmem:[#allocation5 + $0x70] sm:$0xff]
    %v66 = vld [vmem:[#allocation5 + $0x78] sm:$0xff]
    %v67 = vld [vmem:[%s2] sm:$0x1]
    %v69 = vlaneseq
    %v70 = vshrl.u32 %v69, 7
    %v71 = vsub.s32 0, %v70
    %v72 = vrot.slane %v67, %v71
    %74 = vmatprep.subr.mxu0 0.0
    %75 = vmatpush1.msra.mxu0 %v51
    %76 = vmatprep.subr.mxu0 0.0
    %77 = vmatpush1.msra.mxu0 %v52
    %78 = vmatprep.subr.mxu0 0.0
    %79 = vmatpush1.msra.mxu0 %v53
    %80 = vmatprep.subr.mxu0 0.0
    %81 = vmatpush1.msra.mxu0 %v54
    %82 = vmatprep.subr.mxu0 0.0
    %83 = vmatpush1.msra.mxu0 %v55
    %84 = vmatprep.subr.mxu0 0.0
    %85 = vmatpush1.msra.mxu0 %v56
    %86 = vmatprep.subr.mxu0 0.0
    %87 = vmatpush1.msra.mxu0 %v57
    %88 = vmatprep.subr.mxu0 0.0
    %89 = vmatpush1.msra.mxu0 %v58
    %90 = vmatprep.subr.mxu0 0.0
    %91 = vmatpush1.msra.mxu0 %v59
    %92 = vmatprep.subr.mxu0 0.0
    %93 = vmatpush1.msra.mxu0 %v60
    %94 = vmatprep.subr.mxu0 0.0
    %95 = vmatpush1.msra.mxu0 %v61
    %96 = vmatprep.subr.mxu0 0.0
    %97 = vmatpush1.msra.mxu0 %v62
    %98 = vmatprep.subr.mxu0 0.0
    %99 = vmatpush1.msra.mxu0 %v63
    %100 = vmatprep.subr.mxu0 0.0
    %101 = vmatpush1.msra.mxu0 %v64
    %102 = vmatprep.subr.mxu0 0.0
    %103 = vmatpush1.msra.mxu0 %v65
    %104 = vmatprep.subr.mxu0 0.0
    %105 = vmatpush1.msra.mxu0 %v66
    %106 = vmatprep.subr.mxu0 0.0
    %107 = vmatpush1.msra.mxu0 0.0
    %108 = vmatprep.subr.mxu0 0.0
    %109 = vmatpush1.msra.mxu0 0.0
    %110 = vmatprep.subr.mxu0 0.0
    %111 = vmatpush1.msra.mxu0 0.0
    %112 = vmatprep.subr.mxu0 0.0
    %113 = vmatpush1.msra.mxu0 0.0
    %114 = vmatprep.subr.mxu0 0.0
    %115 = vmatpush1.msra.mxu0 0.0
    %116 = vmatprep.subr.mxu0 0.0
    %117 = vmatpush1.msra.mxu0 0.0
    %118 = vmatprep.subr.mxu0 0.0
    %119 = vmatpush1.msra.mxu0 0.0
    %120 = vmatprep.subr.mxu0 0.0
    %121 = vmatpush1.msra.mxu0 0.0
    %122 = vmatprep.subr.mxu0 0.0
    %123 = vmatpush1.msra.mxu0 0.0
    %124 = vmatprep.subr.mxu0 0.0
    %125 = vmatpush1.msra.mxu0 0.0
    %126 = vmatprep.subr.mxu0 0.0
    %127 = vmatpush1.msra.mxu0 0.0
    %128 = vmatprep.subr.mxu0 0.0
    %129 = vmatpush1.msra.mxu0 0.0
    %130 = vmatprep.subr.mxu0 0.0
    %131 = vmatpush1.msra.mxu0 0.0
    %132 = vmatprep.subr.mxu0 0.0
    %133 = vmatpush1.msra.mxu0 0.0
    %134 = vmatprep.subr.mxu0 0.0
    %135 = vmatpush1.msra.mxu0 0.0
    %136 = vmatprep.subr.mxu0 0.0
    %137 = vmatpush1.msra.mxu0 0.0
    %138 = vmatprep.mubr.f32.mxu0 0.0
    %139 = vmatmul.mubr.f32.gmra.mrb[0].mxu0 %v49
    %v140 = vpop.f32.mrb[0].mxu0
    %v141 = vadd.f32 %v72, %v140
    %v142 = vpop.f32.mrb[0].mxu0
    %143 = vmatprep.mubr.f32.mxu0 0.0
    %144 = vmatmul.mubr.f32.gmra.mrb[0].mxu0 %v50
    %v145 = vpop.f32.mrb[0].mxu0
    %v146 = vadd.f32 %v72, %v145
    %v147 = vpop.f32.mrb[0].mxu0
    %148 = vdwg.mxu0
    %v149 = vmul.f32 %v141, 0.5
    %v150 = vmul.f32 %v146, 0.5
    %v151 = vmul.f32 %v141, 0.70710677
    %v152 = vmul.f32 %v146, 0.70710677
    %v153 = verf.f32.pop %v151
    %v154 = verf.f32.pop %v152
    %v155 = vadd.f32 %v153, 1.0
    %v156 = vadd.f32 %v154, 1.0
    %v157 = vmul.f32 %v149, %v155
    %v158 = vmul.f32 %v150, %v156
    %159 = vadd.xlane.f32.xlu0 %v157
    %v160 = vpop.xlane.xlu0 %159
    %161 = vadd.xlane.f32.xlu0 %v158
    %v162 = vpop.xlane.xlu0 %161
    %v163 = vrcp.pop 128.0
    %v164 = vmul.f32 %v160, %v163
    %v165 = vmul.f32 %v162, %v163
    %v166 = vsub.f32 %v157, %v164
    %v167 = vsub.f32 %v158, %v165
    %v168 = vmul.f32 %v166, %v166
    %v169 = vmul.f32 %v167, %v167
    %170 = vadd.xlane.f32.xlu0 %v168
    %v171 = vpop.xlane.xlu0 %170
    %172 = vadd.xlane.f32.xlu0 %v169
    %v173 = vpop.xlane.xlu0 %172
    %v174 = vmul.f32 %v171, %v163
    %v175 = vmul.f32 %v173, %v163
    %v176 = vadd.f32 %v174, 1e-12
    %v177 = vadd.f32 %v175, 1e-12
    %v178 = vrsqrt.pop %v176
    %v179 = vrsqrt.pop %v177
    %v180 = vmul.f32 %v166, %v178
    %v181 = vmul.f32 %v167, %v179
    %v182 = vld [vmem:[%s3] sm:$0x1]
    %v184 = vlaneseq
    %v185 = vshrl.u32 %v184, 7
    %v186 = vsub.s32 0, %v185
    %v187 = vrot.slane %v182, %v186
    %v189 = vmul.f32 %v180, %v187
    %v190 = vmul.f32 %v181, %v187
    %v191 = vld [vmem:[%s4] sm:$0x1]
    %v193 = vlaneseq
    %v194 = vshrl.u32 %v193, 7
    %v195 = vsub.s32 0, %v194
    %v196 = vrot.slane %v191, %v195
    %v198 = vadd.f32 %v189, %v196
    %v199 = vadd.f32 %v190, %v196
    %200 = vst [vmem:[#allocation7] sm:$0xff] %v198
    %201 = vst [vmem:[#allocation7 + $0x8] sm:$0xff] %v199
    // Predicated region
    $region30: #{tpu_custom_call.1} parent=1 // pred_check
      _
    $region31: #{tpu_custom_call.1} parent=1 // pred_check_branch
      %203 = sbr.rel (0) target = $region33
    $region32: #{tpu_custom_call.1} parent=1 // pred_region
      %s205 = ssub.s32 256, 256
      %206 = vsyncadd [#allocation4], %s205
      %s207 = sshll.u32 [#allocation7], 4
      %s208 = int_to_ptr.vmem [resolvable:$true] %s207
      %213 = dma.vmem_to_hbm [thread:$0]  %s208, 256, %s5, [#allocation4], 128, 128, 8
    $region33: #{tpu_custom_call.1} parent=1 // pred_fallthru
      _
    // Predicated region
    $region34: #{tpu_custom_call.1} parent=1 // pred_check
      _
    $region35: #{tpu_custom_call.1} parent=1 // pred_check_branch
      %215 = sbr.rel (0) target = $region37
    $region36: #{tpu_custom_call.1} parent=1 // pred_region
      %216 = dma.done [#allocation4], 256
    $region37: #{tpu_custom_call.1} parent=1 // pred_fallthru
      _
    %217 = vsyncpa [#allocation3], 1
    %218 = vsyncpa [#allocation6], 1
    %219 = vsyncpa [#allocation4], 1

</llo_original>
